<compile_context>
chip_gen: v7x
topology: tpu7x:2x2x1
jax: 0.10.0
libtpu: 0.0.40
codegen_flags: <defaults>
</compile_context>

<pallas_src>
import jax
import jax.numpy as jnp
from jax.experimental import pallas as pl
from jax.experimental.pallas import tpu as pltpu

IMG_SIZE = 16                      # module default: input_size = IMG_SIZE**2
INPUT_SIZE = IMG_SIZE * IMG_SIZE   # 256

_MAX_BATCH_TILE = 4096             # rows per grid step (multiple of 8 and 128)


def net1_kernel(x_ref, w_ref, b_ref, o_ref):
    # x_ref: (TB, D) in VMEM (f32 or bf16 activations)
    # w_ref: (1, D)  in VMEM, f32, resident across the grid
    # b_ref: (1,)    in SMEM, f32 scalar
    # o_ref: (1, TB) in VMEM, f32 (lane-dense output row)
    x = x_ref[...].astype(jnp.float32)      # f32 accumulate (required on v5e VPU)
    w = w_ref[...]                           # (1, D) f32, broadcasts over rows
    b = b_ref[0]                             # scalar from SMEM
    # Linear(D, 1): per-row dot product == broadcast multiply + lane reduce.
    z = jnp.sum(x * w, axis=-1) + b          # (TB,) f32
    # Column -> lane-dense row is a cheap XLU relayout that hides under the DMA.
    o_ref[...] = jax.nn.sigmoid(z).reshape(1, -1).astype(o_ref.dtype)


def net1_forward(x, weight, bias):
    """NET1 forward.

    x: (B, C, H, W) or (B, H, W) activations, f32 (or bf16 if already
       materialized as bf16 upstream — no cast is inserted here).
    weight: (1, D) torch nn.Linear layout; bias: (1,). Both kept in f32.
    Returns (B, 1) f32 sigmoid outputs.
    """
    B = x.shape[0]
    x_flat = x.reshape(B, -1)                            # nn.Flatten(): dims >= 1
    D = x_flat.shape[1]
    weight = jnp.asarray(weight, jnp.float32).reshape(1, D)
    bias = jnp.asarray(bias, jnp.float32).reshape(1)

    # Batch tile: full batch if small, else a 4096-row tile (Pallas pads the
    # final partial block; see header comment on why that is benign).
    tb = B if B <= _MAX_BATCH_TILE else _MAX_BATCH_TILE
    grid = (pl.cdiv(B, tb),)

    out_row = pl.pallas_call(
        net1_kernel,
        out_shape=jax.ShapeDtypeStruct((1, B), jnp.float32),   # lane-dense layout
        grid_spec=pltpu.PrefetchScalarGridSpec(
            num_scalar_prefetch=0,
            grid=grid,
            in_specs=[
                pl.BlockSpec((tb, D), lambda i: (i, 0)),           # x: batch-tiled
                pl.BlockSpec((1, D), lambda i: (0, 0)),            # w: resident
                pl.BlockSpec(memory_space=pltpu.MemorySpace.SMEM),  # bias scalar
            ],
            out_specs=pl.BlockSpec((1, tb), lambda i: (0, i)),     # row per tile
        ),
        compiler_params=pltpu.CompilerParams(
            dimension_semantics=("parallel",),   # shard batch tiles across TCs (v7x)
        ),
    )(x_flat, weight, bias)
    return out_row.reshape(B, 1)


if __name__ == "__main__":
    key = jax.random.PRNGKey(0)
    kx, kw, kb = jax.random.split(key, 3)

    # Small deterministic input consistent with input_size = 16*16 = 256.
    B, C, H, W = 2, 1, IMG_SIZE, IMG_SIZE
    x = jax.random.normal(kx, (B, C, H, W), dtype=jnp.float32)

    # Deterministic Linear(INPUT_SIZE, 1) params (torch-like uniform init range)
    bound = 1.0 / (INPUT_SIZE ** 0.5)
    weight = jax.random.uniform(kw, (1, INPUT_SIZE), minval=-bound, maxval=bound,
                                dtype=jnp.float32)
    bias = jax.random.uniform(kb, (1,), minval=-bound, maxval=bound,
                              dtype=jnp.float32)

    out = net1_forward(x, weight, bias)
    out = jax.block_until_ready(out)

    # Reference check in plain JAX (same math as the torch forward).
    ref = jax.nn.sigmoid(x.reshape(B, -1) @ weight.T + bias)
    assert out.shape == (B, 1)
    assert jnp.allclose(out, ref, atol=1e-5, rtol=1e-5)

    print("KERNEL_OK")
</pallas_src>

<mosaic_0001>
module attributes {stable_mosaic.version = 11 : i64} {
  func.func @net1_kernel(%arg0: i32, %arg1: memref<2x256xf32, #tpu.memory_space<vmem>>, %arg2: memref<1x256xf32, #tpu.memory_space<vmem>>, %arg3: memref<1xf32, #tpu.memory_space<smem>>, %arg4: memref<1x2xf32, #tpu.memory_space<vmem>>) attributes {dimension_semantics = [#tpu.dimension_semantics<parallel>], iteration_bounds = array<i64: 1>, scalar_prefetch = 0 : i64, scratch_operands = 0 : i64, tpu.core_type = #tpu.core_type<tc>, window_params = [{transform_indices = @transform_0, window_bounds = array<i64: 2, 256>}, {pipeline_mode = #tpu.pipeline_mode<synchronous>, transform_indices = @transform_1, window_bounds = array<i64: 1, 256>}, {transform_indices = @transform_2, window_bounds = array<i64: 1>}, {transform_indices = @transform_3, window_bounds = array<i64: 1, 2>}]} {
    %c0 = arith.constant 0 : index
    %c0_0 = arith.constant 0 : index
    %0 = vector.load %arg1[%c0, %c0_0] : memref<2x256xf32, #tpu.memory_space<vmem>>, vector<2x256xf32>
    %c0_1 = arith.constant 0 : index
    %c0_2 = arith.constant 0 : index
    %1 = vector.load %arg2[%c0_1, %c0_2] : memref<1x256xf32, #tpu.memory_space<vmem>>, vector<1x256xf32>
    %c0_3 = arith.constant 0 : index
    %2 = memref.load %arg3[%c0_3] : memref<1xf32, #tpu.memory_space<smem>>
    %3 = vector.broadcast %1 : vector<1x256xf32> to vector<2x256xf32>
    %4 = arith.mulf %0, %3 : vector<2x256xf32>
    %cst = arith.constant dense<0.000000e+00> : vector<2xf32>
    %5 = vector.multi_reduction <add>, %4, %cst [1] : vector<2x256xf32> to vector<2xf32>
    %6 = vector.broadcast %2 : f32 to vector<2xf32>
    %7 = arith.addf %5, %6 : vector<2xf32>
    %8 = arith.negf %7 : vector<2xf32>
    %9 = math.exp %8 : vector<2xf32>
    %cst_4 = arith.constant 1.000000e+00 : f32
    %10 = vector.broadcast %cst_4 : f32 to vector<2xf32>
    %11 = arith.addf %10, %9 : vector<2xf32>
    %12 = arith.divf %10, %11 : vector<2xf32>
    %13 = vector.shape_cast %12 : vector<2xf32> to vector<1x2xf32>
    %c0_5 = arith.constant 0 : index
    %c0_6 = arith.constant 0 : index
    %14 = vector.load %arg4[%c0_5, %c0_6] : memref<1x2xf32, #tpu.memory_space<vmem>>, vector<1x2xf32>
    tpu.vector_store %arg4[%c0_5, %c0_6], %13 {strides = array<i32>} : memref<1x2xf32, #tpu.memory_space<vmem>>, vector<1x2xf32>,
    return
  }
  func.func @transform_0(%arg0: i32) -> (i32, i32) {
    %c0_i32 = arith.constant 0 : i32
    %c0_i32_0 = arith.constant 0 : i32
    return %arg0, %c0_i32 : i32, i32
  }
  func.func @transform_1(%arg0: i32) -> (i32, i32) {
    %c0_i32 = arith.constant 0 : i32
    %c0_i32_0 = arith.constant 0 : i32
    %c0_i32_1 = arith.constant 0 : i32
    return %c0_i32, %c0_i32_0 : i32, i32
  }
  func.func @transform_2(%arg0: i32) -> i32 {
    %c0_i32 = arith.constant 0 : i32
    %c0_i32_0 = arith.constant 0 : i32
    return %c0_i32 : i32
  }
  func.func @transform_3(%arg0: i32) -> (i32, i32) {
    %c0_i32 = arith.constant 0 : i32
    %c0_i32_0 = arith.constant 0 : i32
    return %c0_i32, %arg0 : i32, i32
  }
}

</mosaic_0001>

<llo_original>
// kernel: tpu_custom_call.1
$region0: #{tpu_custom_call.1}
  #allocation0 [shape = 'u32[]', space=smem, size = 0x4, offset = 0x4, fixed_abs, tag = 'smem constant byte address 0x4 - core index']
  #allocation1 [shape = 'u32[144,128]{1,0:T(1,128)}', space=vmem, size = 0x12000, scoped, tag = 'internal scratch']
  #allocation2 [shape = 'f32[1]{0:T(128)S(6)}', space=smem, size = 0x200, scoped, tag = 'scoped memory for tpu_custom_call.1']
  %s0 = inlined_call_operand.hbm [shape: f32[2,256], index: 0, kind: input, shape index: {}]
  %s1 = inlined_call_operand.vmem [shape: f32[1,256], index: 1, kind: input, shape index: {}]
  %s2 = inlined_call_operand.<no memory space> [shape: f32[1], index: 2, kind: input, shape index: {}]
  %s3 = inlined_call_operand.hbm [shape: f32[1,2], index: 3, kind: output, shape index: {}]
  %s4 = sld [smem:[#allocation0]]
  $region26: #{tpu_custom_call.1} parent=0
    _
  %s6 = ssub.s32 1, %s4
  %s7 = scalar_select 0, %s6, %s4
  %8 = sst [smem:[#allocation2]] %s2
  $region1: #{tpu_custom_call.1} parent=0
    #allocation3 [shape = 'u8[2048]{0}', space=vmem, size = 0x800, scoped, tag = 'input window, operand 0, single buffered']
    #allocation4 [shape = 's32[1]{0}', space=sflag, size = 0x4, scoped, tag = 'scoped memory for tpu_custom_call.1']
    #allocation5 [shape = 's32[1]{0}', space=sflag, size = 0x4, scoped, tag = 'scoped memory for tpu_custom_call.1']
    #allocation6 [shape = 'u8[512]{0}', space=vmem, size = 0x400, scoped, tag = 'output window, operand 0, single buffered']
    %9 = vsyncpa [#allocation4], 0
    %10 = vsyncpa [#allocation5], 0
    // Predicated region
    $region2: #{tpu_custom_call.1} parent=1 // pred_check
      _
    $region3: #{tpu_custom_call.1} parent=1 // pred_check_branch
      %12 = sbr.rel (0) target = $region5
    $region4: #{tpu_custom_call.1} parent=1 // pred_region
      %s14 = ssub.s32 64, 64
      %15 = vsyncadd [#allocation4], %s14
      %s17 = sshll.u32 [#allocation3], 4
      %s18 = int_to_ptr.vmem [resolvable:$true] %s17
      %20 = dma.hbm_to_vmem [thread:$0]  %s0, 64, %s18, [#allocation4]
    $region5: #{tpu_custom_call.1} parent=1 // pred_fallthru
      _
    // Predicated region
    $region6: #{tpu_custom_call.1} parent=1 // pred_check
      _
    $region7: #{tpu_custom_call.1} parent=1 // pred_check_branch
      %22 = sbr.rel (0) target = $region9
    $region8: #{tpu_custom_call.1} parent=1 // pred_region
      _
    $region9: #{tpu_custom_call.1} parent=1 // pred_fallthru
      _
    // Predicated region
    $region10: #{tpu_custom_call.1} parent=1 // pred_check
      _
    $region11: #{tpu_custom_call.1} parent=1 // pred_check_branch
      %24 = sbr.rel (0) target = $region13
    $region12: #{tpu_custom_call.1} parent=1 // pred_region
      _
    $region13: #{tpu_custom_call.1} parent=1 // pred_fallthru
      _
    // Predicated region
    $region14: #{tpu_custom_call.1} parent=1 // pred_check
      _
    $region15: #{tpu_custom_call.1} parent=1 // pred_check_branch
      %26 = sbr.rel (0) target = $region17
    $region16: #{tpu_custom_call.1} parent=1 // pred_region
      %27 = dma.done [#allocation4], 64
    $region17: #{tpu_custom_call.1} parent=1 // pred_fallthru
      _
    %v28 = vld [vmem:[#allocation3] sm:$0xf]
    %v29 = vld [vmem:[%s1] sm:$0x3]
    %s30 = sld [smem:[#allocation2]]
    %v32 = vlaneseq
    %v33 = vshrl.u32 %v32, 7
    %v34 = vsub.s32 0, %v33
    %v35 = vrot.slane %v29, %v34
    %v36 = vlaneseq
    %v37 = vshrl.u32 %v36, 7
    %v38 = vsub.s32 1, %v37
    %v39 = vrot.slane %v29, %v38
    %v40 = vcombine.low %v35, %v39
    %v42 = vunpack.c.l.s4 1983009808
    %v43 = vunpack.c.0.s8 %v42
    %v44 = vlaneseq
    %v45 = vshrl.u32 %v44, 7
    %v46 = vsub.s32 %v43, %v45
    %v47 = vrot.slane %v40, %v46
    %v49 = vmul.f32 %v28, %v47
    %v52 = vunpack.c.l.s4 1983009808
    %v53 = vunpack.c.0.s8 %v52
    %v54 = vlaneseq
    %v55 = vshrl.u32 %v54, 7
    %v56 = vsub.s32 %v53, %v55
    %v57 = vrot.slane %v49, %v56
    %v58 = vcombine.high %v57, %v57
    %vm61 = vcmask 1041408
    %v62 = vsel %vm61, %v57, 0.0
    %v63 = vsel %vm61, %v58, 0.0
    %v64 = vadd.f32 %v62, %v63
    %65 = vadd.xlane.f32.xlu0 %v64
    %v66 = vpop.xlane.xlu0 %65
    %v67 = vstv %s30
    %v68 = vadd.f32 %v66, %v67
    %v69 = vxor.u32 %v68, 2147483648
    %v70 = vmul.f32 %v69, 1.442695
    %v71 = vpow.pop %v70
    %v72 = vadd.f32 %v71, 1.0
    %v73 = vrcp.pop %v72
    %v74 = vmul.f32 1.0, %v73
    %v76 = vlaneseq
    %v77 = vand.u32 %v76, 127
    %v78 = vlaneseq
    %v79 = vshrl.u32 %v78, 7
    %v80 = vsub.s32 %v77, %v79
    %v81 = vrot.slane %v74, %v80
    %vm83 = vcmask 8192
    %84 = vst.msk [vmem:[#allocation6] sm:$0x1] %vm83, %v81
    // Predicated region
    $region18: #{tpu_custom_call.1} parent=1 // pred_check
      _
    $region19: #{tpu_custom_call.1} parent=1 // pred_check_branch
      %86 = sbr.rel (0) target = $region21
    $region20: #{tpu_custom_call.1} parent=1 // pred_region
      %s88 = ssub.s32 16, 16
      %89 = vsyncadd [#allocation5], %s88
      %s91 = sshll.u32 [#allocation6], 4
      %s92 = int_to_ptr.vmem [resolvable:$true] %s91
      %94 = dma.vmem_to_hbm [thread:$0]  %s92, 16, %s3, [#allocation5]
    $region21: #{tpu_custom_call.1} parent=1 // pred_fallthru
      _
    // Predicated region
    $region22: #{tpu_custom_call.1} parent=1 // pred_check
      _
    $region23: #{tpu_custom_call.1} parent=1 // pred_check_branch
      %96 = sbr.rel (0) target = $region25
    $region24: #{tpu_custom_call.1} parent=1 // pred_region
      %97 = dma.done [#allocation5], 16
    $region25: #{tpu_custom_call.1} parent=1 // pred_fallthru
      _
    %98 = vsyncpa [#allocation4], 1
    %99 = vsyncpa [#allocation5], 1

</llo_original>
